<compile_context>
chip_gen: v6e
topology: v6e:2x2x1
jax: 0.10.0
libtpu: 0.0.40
codegen_flags: <defaults>
</compile_context>

<pallas_src>
import jax
import jax.numpy as jnp
from jax.experimental import pallas as pl
from jax.experimental.pallas import tpu as pltpu

# ---- problem sizes (consistent with the module) ----
N_STATES = 4      # env observation dim
N_ACTIONS = 2     # env action dim
HIDDEN = 30       # fixed by the module

# ---- padded tile sizes ----
B_TILE_MAX = 512  # max batch rows per grid step (sublane tile)
H_PAD = 32        # padded hidden dim (30 -> 32); col 30 is the constant-1 unit
A_OUT = 8         # padded action dim for the output store (2 -> 8)
ONE_COL = HIDDEN  # index of the constant-1 hidden unit (a padding column)


def _mlp_kernel(x_ref, w1_ref, b1_ref, w2_ref, o_ref):
    # hidden Linear (StandardScaler already folded into w1/b1) + ReLU
    h = jnp.dot(x_ref[...], w1_ref[...], preferred_element_type=jnp.float32)
    h = jnp.maximum(h + b1_ref[...], 0.0)          # (b_tile, H_PAD) + (1, H_PAD)
    # output Linear; b2 is folded into w2 via the constant-1 hidden column
    o_ref[...] = jnp.dot(h, w2_ref[...],
                         preferred_element_type=jnp.float32).astype(o_ref.dtype)


def _round_up(n, m):
    return pl.cdiv(n, m) * m


def prepare_params(params):
    """One-time parameter prep: fold the StandardScaler into the first Linear,
    fold b2 into w2 via a constant-1 hidden unit, and zero-pad to
    TPU-friendly tiles (all padding is inert)."""
    mean, scale = params["mean"], params["scale"]
    w1, b1, w2, b2 = params["w1"], params["b1"], params["w2"], params["b2"]

    inv_scale = 1.0 / scale
    w1f = (w1 * inv_scale[:, None]).astype(jnp.float32)          # (4, 30)
    b1f = (b1 - (mean * inv_scale) @ w1).astype(jnp.float32)     # (30,)

    # Padded first layer: (N_STATES, H_PAD); cols >= 30 are zero.
    w1_pad = jnp.zeros((N_STATES, H_PAD), jnp.float32).at[:, :HIDDEN].set(w1f)
    # Padded bias: (1, H_PAD); b1_pad[0, ONE_COL] = 1 -> ReLU(1) = 1 gives the
    # constant hidden unit that carries b2 through the second matmul.
    b1_pad = (jnp.zeros((1, H_PAD), jnp.float32)
              .at[0, :HIDDEN].set(b1f)
              .at[0, ONE_COL].set(1.0))
    # Padded second layer: (H_PAD, A_OUT); row ONE_COL holds b2.
    w2_pad = (jnp.zeros((H_PAD, A_OUT), jnp.float32)
              .at[:HIDDEN, :N_ACTIONS].set(w2.astype(jnp.float32))
              .at[ONE_COL, :N_ACTIONS].set(b2.astype(jnp.float32)))

    return dict(
        # padded params used by the Pallas kernel
        w1=w1_pad, b1=b1_pad, w2=w2_pad,
        # folded, unpadded params for the small-batch fused-XLA fallback
        w1_fold=w1f, b1_fold=b1f, w2_raw=w2.astype(jnp.float32),
        b2_raw=b2.astype(jnp.float32),
    )


def neural_network_forward(x, prepared, *, b_tile_max=B_TILE_MAX,
                           min_pallas_batch=64):
    """x: (n_states,) single state or (B, n_states) batch of states.
    Returns (B, n_actions) float32 (B=1 for a single state)."""
    if x.ndim == 1:
        x = x.reshape(1, -1)
    x = x.astype(jnp.float32)
    B = x.shape[0]

    if B < min_pallas_batch:
        # Tiny/predict-style batches: launch + per-step overhead would dominate
        # a custom call; a fused XLA 4->30->2 MLP is faster (perf feedback).
        h = jnp.maximum(x @ prepared["w1_fold"] + prepared["b1_fold"], 0.0)
        return h @ prepared["w2_raw"] + prepared["b2_raw"]

    b_tile = min(b_tile_max, _round_up(B, 8))    # sublane-aligned batch tile
    b_pad = _round_up(B, b_tile)
    if b_pad != B:
        x = jnp.pad(x, ((0, b_pad - B), (0, 0)))  # row-pad only; feature dim untouched
    nb = b_pad // b_tile                          # >= 2 for large B (v7x 2-TC sharding)

    out_pad = pl.pallas_call(
        _mlp_kernel,
        out_shape=jax.ShapeDtypeStruct((b_pad, A_OUT), jnp.float32),
        grid=(nb,),
        in_specs=[
            pl.BlockSpec((b_tile, N_STATES), lambda i: (i, 0)),  # x   (streamed)
            pl.BlockSpec((N_STATES, H_PAD), lambda i: (0, 0)),   # w1  (resident)
            pl.BlockSpec((1, H_PAD), lambda i: (0, 0)),          # b1  (resident)
            pl.BlockSpec((H_PAD, A_OUT), lambda i: (0, 0)),      # w2+b2 (resident)
        ],
        out_specs=pl.BlockSpec((b_tile, A_OUT), lambda i: (i, 0)),
        compiler_params=pltpu.CompilerParams(
            dimension_semantics=("parallel",)),
    )(x, prepared["w1"], prepared["b1"], prepared["w2"])

    # slice out the real (B, n_actions) result from the (b_pad, 8) slab
    return out_pad[:B, :N_ACTIONS]


def init_params(key):
    """Deterministic parameter init mirroring the module's __init__ shapes."""
    ks = jax.random.split(key, 6)
    # hidden.weight ~ N(0, 0.1), stored transposed: [n_states, 30]
    w1 = 0.1 * jax.random.normal(ks[0], (N_STATES, HIDDEN), jnp.float32)
    b1 = 0.01 * jax.random.normal(ks[1], (HIDDEN,), jnp.float32)
    # out.weight ~ N(0, 0.1), stored transposed: [30, n_actions]
    w2 = 0.1 * jax.random.normal(ks[2], (HIDDEN, N_ACTIONS), jnp.float32)
    b2 = 0.01 * jax.random.normal(ks[3], (N_ACTIONS,), jnp.float32)
    # StandardScaler stand-in (deterministic synthetic statistics)
    mean = jax.random.normal(ks[4], (N_STATES,), jnp.float32)
    scale = 0.5 + jax.nn.softplus(jax.random.normal(ks[5], (N_STATES,),
                                                    jnp.float32))
    return dict(mean=mean, scale=scale, w1=w1, b1=b1, w2=w2, b2=b2)


def _reference(x, p):
    """Unfolded reference matching the original module's forward semantics."""
    xs = (x - p["mean"]) / p["scale"]
    h = jnp.maximum(xs @ p["w1"] + p["b1"], 0.0)
    return h @ p["w2"] + p["b2"]


if __name__ == "__main__":
    key = jax.random.PRNGKey(0)
    k_param, k_x = jax.random.split(key)
    params = init_params(k_param)
    prepared = prepare_params(params)            # scaler/bias fold + pad, once

    # Large batch of env states: exercises the Pallas path with b_tile=512,
    # nb=3 grid steps (>=2 so the "parallel" axis can use both v7x cores),
    # and batch-row padding (1040 -> 1536).
    B = 1040
    x = jax.random.normal(k_x, (B, N_STATES), jnp.float32)
    out = jax.block_until_ready(neural_network_forward(x, prepared))
    ref = _reference(x, params)
    assert out.shape == (B, N_ACTIONS), out.shape
    assert jnp.allclose(out, ref, atol=1e-4, rtol=1e-4)

    # Small batch forced through the Pallas path (b_tile=8, single grid step).
    out8 = jax.block_until_ready(
        neural_network_forward(x[:8], prepared, min_pallas_batch=1))
    assert out8.shape == (8, N_ACTIONS), out8.shape
    assert jnp.allclose(out8, ref[:8], atol=1e-4, rtol=1e-4)

    # Single-state predict() path: routed to the fused XLA fallback.
    out1 = jax.block_until_ready(neural_network_forward(x[0], prepared))
    assert out1.shape == (1, N_ACTIONS), out1.shape
    assert jnp.allclose(out1, ref[:1], atol=1e-4, rtol=1e-4)

    # TODO(synk): training path (update()/SGD/MSELoss) and sklearn scaler
    # fitting are outside forward() and not implemented here.
    print("KERNEL_OK")
</pallas_src>

<mosaic_0001>
module attributes {stable_mosaic.version = 11 : i64} {
  func.func @_mlp_kernel(%arg0: i32, %arg1: memref<512x4xf32, #tpu.memory_space<vmem>>, %arg2: memref<4x32xf32, #tpu.memory_space<vmem>>, %arg3: memref<1x32xf32, #tpu.memory_space<vmem>>, %arg4: memref<32x8xf32, #tpu.memory_space<vmem>>, %arg5: memref<512x8xf32, #tpu.memory_space<vmem>>) attributes {dimension_semantics = [#tpu.dimension_semantics<parallel>], iteration_bounds = array<i64: 3>, scalar_prefetch = 0 : i64, scratch_operands = 0 : i64, tpu.core_type = #tpu.core_type<tc>, window_params = [{transform_indices = @transform_0, window_bounds = array<i64: 512, 4>}, {pipeline_mode = #tpu.pipeline_mode<synchronous>, transform_indices = @transform_1, window_bounds = array<i64: 4, 32>}, {pipeline_mode = #tpu.pipeline_mode<synchronous>, transform_indices = @transform_2, window_bounds = array<i64: 1, 32>}, {pipeline_mode = #tpu.pipeline_mode<synchronous>, transform_indices = @transform_3, window_bounds = array<i64: 32, 8>}, {transform_indices = @transform_4, window_bounds = array<i64: 512, 8>}]} {
    %c0 = arith.constant 0 : index
    %c0_0 = arith.constant 0 : index
    %0 = vector.load %arg1[%c0, %c0_0] : memref<512x4xf32, #tpu.memory_space<vmem>>, vector<512x4xf32>
    %c0_1 = arith.constant 0 : index
    %c0_2 = arith.constant 0 : index
    %1 = vector.load %arg2[%c0_1, %c0_2] : memref<4x32xf32, #tpu.memory_space<vmem>>, vector<4x32xf32>
    %cst = arith.constant dense<0.000000e+00> : vector<512x32xf32>
    %2 = tpu.matmul %0, %1, %cst {dimension_numbers = #tpu.dot_dimension_numbers<[1], [0], [0], [1], [0, 0, 1, 1], [], []>} : vector<512x4xf32>, vector<4x32xf32>, vector<512x32xf32> -> vector<512x32xf32>
    %c0_3 = arith.constant 0 : index
    %c0_4 = arith.constant 0 : index
    %3 = vector.load %arg3[%c0_3, %c0_4] : memref<1x32xf32, #tpu.memory_space<vmem>>, vector<1x32xf32>
    %4 = vector.broadcast %3 : vector<1x32xf32> to vector<512x32xf32>
    %5 = arith.addf %2, %4 : vector<512x32xf32>
    %cst_5 = arith.constant 0.000000e+00 : f32
    %6 = vector.broadcast %cst_5 : f32 to vector<512x32xf32>
    %7 = arith.maximumf %5, %6 : vector<512x32xf32>
    %c0_6 = arith.constant 0 : index
    %c0_7 = arith.constant 0 : index
    %8 = vector.load %arg4[%c0_6, %c0_7] : memref<32x8xf32, #tpu.memory_space<vmem>>, vector<32x8xf32>
    %cst_8 = arith.constant dense<0.000000e+00> : vector<512x8xf32>
    %9 = tpu.matmul %7, %8, %cst_8 {dimension_numbers = #tpu.dot_dimension_numbers<[1], [0], [0], [1], [0, 0, 1, 1], [], []>} : vector<512x32xf32>, vector<32x8xf32>, vector<512x8xf32> -> vector<512x8xf32>
    %c0_9 = arith.constant 0 : index
    %c0_10 = arith.constant 0 : index
    %10 = vector.load %arg5[%c0_9, %c0_10] : memref<512x8xf32, #tpu.memory_space<vmem>>, vector<512x8xf32>
    tpu.vector_store %arg5[%c0_9, %c0_10], %9 {strides = array<i32>} : memref<512x8xf32, #tpu.memory_space<vmem>>, vector<512x8xf32>,
    return
  }
  func.func @transform_0(%arg0: i32) -> (i32, i32) {
    %c0_i32 = arith.constant 0 : i32
    %c0_i32_0 = arith.constant 0 : i32
    return %arg0, %c0_i32 : i32, i32
  }
  func.func @transform_1(%arg0: i32) -> (i32, i32) {
    %c0_i32 = arith.constant 0 : i32
    %c0_i32_0 = arith.constant 0 : i32
    %c0_i32_1 = arith.constant 0 : i32
    return %c0_i32, %c0_i32_0 : i32, i32
  }
  func.func @transform_2(%arg0: i32) -> (i32, i32) {
    %c0_i32 = arith.constant 0 : i32
    %c0_i32_0 = arith.constant 0 : i32
    %c0_i32_1 = arith.constant 0 : i32
    return %c0_i32, %c0_i32_0 : i32, i32
  }
  func.func @transform_3(%arg0: i32) -> (i32, i32) {
    %c0_i32 = arith.constant 0 : i32
    %c0_i32_0 = arith.constant 0 : i32
    %c0_i32_1 = arith.constant 0 : i32
    return %c0_i32, %c0_i32_0 : i32, i32
  }
  func.func @transform_4(%arg0: i32) -> (i32, i32) {
    %c0_i32 = arith.constant 0 : i32
    %c0_i32_0 = arith.constant 0 : i32
    return %arg0, %c0_i32 : i32, i32
  }
}

</mosaic_0001>

<llo_original>
// kernel: tpu_custom_call.1
$region0: #{tpu_custom_call.1}
  #allocation0 [shape = 'u32[]', space=smem, size = 0x4, offset = 0x4, fixed_abs, tag = 'smem constant byte address 0x4 - core index']
  #allocation1 [shape = 'u32[144,128]{1,0:T(1,128)}', space=vmem, size = 0x12000, scoped, tag = 'internal scratch']
  %s0 = inlined_call_operand.vmem [shape: f32[1536,4], index: 0, kind: input, shape index: {}]
  %s1 = inlined_call_operand.vmem [shape: f32[4,32], index: 1, kind: input, shape index: {}]
  %s2 = inlined_call_operand.vmem [shape: f32[1,32], index: 2, kind: input, shape index: {}]
  %s3 = inlined_call_operand.vmem [shape: f32[32,8], index: 3, kind: input, shape index: {}]
  %s4 = inlined_call_operand.vmem [shape: f32[1536,8], index: 4, kind: output, shape index: {}]
  %s5 = sld [smem:[#allocation0]]
  $region49: #{tpu_custom_call.1} parent=0
    _
  %s7 = ssub.s32 1, %s5
  %s8 = scalar_select 0, %s7, %s5
  loop: start=0, step=1, limit=5
  $region2: #{tpu_custom_call.1} parent=0 // loop_pre_header
    _
  $region3: #{tpu_custom_call.1} parent=0 // loop_header
    %s10 = sphi 0, %s14
    %p11 = scmp.ge.s32.totalorder %s10, 5
    %s20 = sphi 0, %s22
    %s23 = sphi 0, %s20
    %s24 = sphi 0, %s23
    %s40 = sphi 0, %s24
    %s44 = sphi 0, %s44
    %s46 = sphi 0, %s44
    %s47 = sphi 0, %s46
    %s61 = sphi 0, %s47
    %s65 = sphi 0, %s65
    %s67 = sphi 0, %s65
    %s68 = sphi 0, %s67
    %s82 = sphi 0, %s68
    %s86 = sphi 0, %s86
    %s88 = sphi 0, %s86
    %s89 = sphi 0, %s88
    %s103 = sphi 0, %s89
    %s109 = sphi 0, %s111
    %s112 = sphi 0, %s109
    %s113 = sphi 0, %s112
    %s129 = sphi 0, %s113
  $region4: #{tpu_custom_call.1} parent=0 // loop_header_branch
    %13 = sbr.rel (%p11) target = $region8
  $region5: #{tpu_custom_call.1} parent=0 // loop_body
    %s15 = ssub.s32 %s10, 1
    %s16 = ssub.s32 %s10, 2
    %s17 = sadd.s32 %s10, 1
    %s18 = ssub.s32 %s10, %s17
    %p19 = scmp.eq.s32.totalorder %s18, 0
    %s21 = sadd.s32 %s20, 1
    %s22 = scalar_select %p19, %s20, %s21
    %p25 = pneg %p19
    %p26 = scmp.eq.s32.totalorder %s10, 2
    %p27 = por %p25, %p26
    %p28 = scmp.ne.s32.totalorder %s20, %s23
    %p29 = scmp.eq.s32.totalorder %s10, 0
    %p30 = por %p28, %p29
    %p31 = scmp.ne.s32.totalorder %s20, %s23
    %p32 = scmp.eq.s32.totalorder %s15, 2
    %p33 = por %p31, %p32
    %p34 = scmp.ne.s32.totalorder %s23, %s24
    %p35 = scmp.eq.s32.totalorder %s15, 0
    %p36 = por %p34, %p35
    %p37 = scmp.ne.s32.totalorder %s23, %s24
    %p38 = scmp.eq.s32.totalorder %s16, 2
    %p39 = por %p37, %p38
    %p41 = scmp.ne.s32.totalorder %s24, %s40
    %p42 = scmp.eq.s32.totalorder %s16, 0
    %p43 = por %p41, %p42
    %s45 = sadd.s32 %s44, 1
    %p48 = scmp.eq.s32.totalorder %s10, 2
    %p49 = scmp.ne.s32.totalorder %s44, %s46
    %p50 = scmp.eq.s32.totalorder %s10, 0
    %p51 = por %p49, %p50
    %p52 = scmp.ne.s32.totalorder %s44, %s46
    %p53 = scmp.eq.s32.totalorder %s15, 2
    %p54 = por %p52, %p53
    %p55 = scmp.ne.s32.totalorder %s46, %s47
    %p56 = scmp.eq.s32.totalorder %s15, 0
    %p57 = por %p55, %p56
    %p58 = scmp.ne.s32.totalorder %s46, %s47
    %p59 = scmp.eq.s32.totalorder %s16, 2
    %p60 = por %p58, %p59
    %p62 = scmp.ne.s32.totalorder %s47, %s61
    %p63 = scmp.eq.s32.totalorder %s16, 0
    %p64 = por %p62, %p63
    %s66 = sadd.s32 %s65, 1
    %p69 = scmp.eq.s32.totalorder %s10, 2
    %p70 = scmp.ne.s32.totalorder %s65, %s67
    %p71 = scmp.eq.s32.totalorder %s10, 0
    %p72 = por %p70, %p71
    %p73 = scmp.ne.s32.totalorder %s65, %s67
    %p74 = scmp.eq.s32.totalorder %s15, 2
    %p75 = por %p73, %p74
    %p76 = scmp.ne.s32.totalorder %s67, %s68
    %p77 = scmp.eq.s32.totalorder %s15, 0
    %p78 = por %p76, %p77
    %p79 = scmp.ne.s32.totalorder %s67, %s68
    %p80 = scmp.eq.s32.totalorder %s16, 2
    %p81 = por %p79, %p80
    %p83 = scmp.ne.s32.totalorder %s68, %s82
    %p84 = scmp.eq.s32.totalorder %s16, 0
    %p85 = por %p83, %p84
    %s87 = sadd.s32 %s86, 1
    %p90 = scmp.eq.s32.totalorder %s10, 2
    %p91 = scmp.ne.s32.totalorder %s86, %s88
    %p92 = scmp.eq.s32.totalorder %s10, 0
    %p93 = por %p91, %p92
    %p94 = scmp.ne.s32.totalorder %s86, %s88
    %p95 = scmp.eq.s32.totalorder %s15, 2
    %p96 = por %p94, %p95
    %p97 = scmp.ne.s32.totalorder %s88, %s89
    %p98 = scmp.eq.s32.totalorder %s15, 0
    %p99 = por %p97, %p98
    %p100 = scmp.ne.s32.totalorder %s88, %s89
    %p101 = scmp.eq.s32.totalorder %s16, 2
    %p102 = por %p100, %p101
    %p104 = scmp.ne.s32.totalorder %s89, %s103
    %p105 = scmp.eq.s32.totalorder %s16, 0
    %p106 = por %p104, %p105
    %s107 = ssub.s32 %s10, %s17
    %p108 = scmp.eq.s32.totalorder %s107, 0
    %s110 = sadd.s32 %s109, 1
    %s111 = scalar_select %p108, %s109, %s110
    %p114 = pneg %p108
    %p115 = scmp.eq.s32.totalorder %s10, 2
    %p116 = por %p114, %p115
    %p117 = scmp.ne.s32.totalorder %s109, %s112
    %p118 = scmp.eq.s32.totalorder %s10, 0
    %p119 = por %p117, %p118
    %p120 = scmp.ne.s32.totalorder %s109, %s112
    %p121 = scmp.eq.s32.totalorder %s15, 2
    %p122 = por %p120, %p121
    %p123 = scmp.ne.s32.totalorder %s112, %s113
    %p124 = scmp.eq.s32.totalorder %s15, 0
    %p125 = por %p123, %p124
    %p126 = scmp.ne.s32.totalorder %s112, %s113
    %p127 = scmp.eq.s32.totalorder %s16, 2
    %p128 = por %p126, %p127
    %p130 = scmp.ne.s32.totalorder %s113, %s129
    %p131 = scmp.eq.s32.totalorder %s16, 0
    %p132 = por %p130, %p131
    %p133 = scmp.le.s32.totalorder 1, %s10
    %p134 = scmp.lt.s32.totalorder %s10, 4
    %p135 = pnand %p133, %p134
    %p136 = pneg %p135
    // Predicated region
    $region9: #{tpu_custom_call.1} parent=5 // pred_check
      _
    $region10: #{tpu_custom_call.1} parent=5 // pred_check_branch
      %138 = sbr.rel (%p135) target = $region12
    $region11: #{tpu_custom_call.1} parent=5 // pred_region
      %s139 = ssub.s32 %s10, 1
      // Predicated region
      $region13: #{tpu_custom_call.1} parent=11 // pred_check
        %p140 = pneg %p57
      $region14: #{tpu_custom_call.1} parent=11 // pred_check_branch
        %142 = sbr.rel (%p140) target = $region16
      $region15: #{tpu_custom_call.1} parent=11 // pred_region
        _
      $region16: #{tpu_custom_call.1} parent=11 // pred_fallthru
        _
      // Predicated region
      $region17: #{tpu_custom_call.1} parent=11 // pred_check
        %p143 = pneg %p78
      $region18: #{tpu_custom_call.1} parent=11 // pred_check_branch
        %145 = sbr.rel (%p143) target = $region20
      $region19: #{tpu_custom_call.1} parent=11 // pred_region
        _
      $region20: #{tpu_custom_call.1} parent=11 // pred_fallthru
        _
      // Predicated region
      $region21: #{tpu_custom_call.1} parent=11 // pred_check
        %p146 = pneg %p99
      $region22: #{tpu_custom_call.1} parent=11 // pred_check_branch
        %148 = sbr.rel (%p146) target = $region24
      $region23: #{tpu_custom_call.1} parent=11 // pred_region
        _
      $region24: #{tpu_custom_call.1} parent=11 // pred_fallthru
        _
    $region12: #{tpu_custom_call.1} parent=5 // pred_fallthru
      _
    %p149 = scmp.lt.s32.totalorder %s10, 3
    // Predicated region
    $region25: #{tpu_custom_call.1} parent=5 // pred_check
      %p150 = pneg %p149
    $region26: #{tpu_custom_call.1} parent=5 // pred_check_branch
      %152 = sbr.rel (%p150) target = $region28
    $region27: #{tpu_custom_call.1} parent=5 // pred_region
      // Predicated region
      $region29: #{tpu_custom_call.1} parent=27 // pred_check
        %p153 = pneg %p30
      $region30: #{tpu_custom_call.1} parent=27 // pred_check_branch
        %155 = sbr.rel (%p153) target = $region32
      $region31: #{tpu_custom_call.1} parent=27 // pred_region
        %s156 = smul.u32 64, %s10
        %p157 = scmp.lt.s32.totalorder %s156, 191
        %s158 = scalar_select %p157, %s156, 191
        %s159 = smul.addr %s158, 8
        %s160 = scalar_lea.vmem %s0, %s159
        %s161 = smul.u32 64, %s10
      $region32: #{tpu_custom_call.1} parent=27 // pred_fallthru
        _
    $region28: #{tpu_custom_call.1} parent=5 // pred_fallthru
      _
    %p162 = scmp.le.s32.totalorder 1, %s10
    %p163 = scmp.lt.s32.totalorder %s10, 4
    %p164 = pnand %p162, %p163
    %p165 = pneg %p164
    // Predicated region
    $region33: #{tpu_custom_call.1} parent=5 // pred_check
      _
    $region34: #{tpu_custom_call.1} parent=5 // pred_check_branch
      %167 = sbr.rel (%p164) target = $region36
    $region35: #{tpu_custom_call.1} parent=5 // pred_region
      %s168 = ssub.s32 %s10, 1
      %s169 = smul.u32 64, %s15
      %p170 = scmp.lt.s32.totalorder %s169, 191
      %s171 = scalar_select %p170, %s169, 191
      %s172 = smul.addr %s171, 8
      %s173 = scalar_lea.vmem %s0, %s172
      %p174 = pneg %p36
      %p175 = pneg %p33
      %p176 = pneg %p57
      %p177 = pneg %p54
      %p178 = pneg %p78
      %p179 = pneg %p75
      %p180 = pneg %p99
      %p181 = pneg %p96
      %p182 = pneg %p125
      %p183 = pneg %p122
      %s184 = smul.u32 64, %s15
      %p185 = scmp.lt.s32.totalorder %s184, 191
      %s186 = scalar_select %p185, %s184, 191
      %s187 = smul.addr %s186, 8
      %s188 = scalar_lea.vmem %s4, %s187
      %s189 = smul.u32 64, %s15
      %p190 = scmp.lt.s32.totalorder %s189, 191
      %s191 = scalar_select %p190, %s189, 191
      %s192 = smul.addr %s191, 8
      %s193 = scalar_lea.vmem %s0, %s192
      %s194 = smul.u32 64, %s15
      %s195 = smul.u32 64, %s15
      %p196 = scmp.lt.s32.totalorder %s195, 191
      %s197 = scalar_select %p196, %s195, 191
      %s198 = smul.addr %s197, 8
      %s199 = scalar_lea.vmem %s4, %s198
      %s200 = smul.u32 64, %s15
      %v201 = vld [vmem:[%s193] sm:$0xff]
      %v202 = vld [vmem:[%s193 + $0x8] sm:$0xff]
      %v203 = vld [vmem:[%s193 + $0x10] sm:$0xff]
      %v204 = vld [vmem:[%s193 + $0x18] sm:$0xff]
      %v205 = vld [vmem:[%s193 + $0x20] sm:$0xff]
      %v206 = vld [vmem:[%s193 + $0x28] sm:$0xff]
      %v207 = vld [vmem:[%s193 + $0x30] sm:$0xff]
      %v208 = vld [vmem:[%s193 + $0x38] sm:$0xff]
      %v209 = vld [vmem:[%s193 + $0x40] sm:$0xff]
      %v210 = vld [vmem:[%s193 + $0x48] sm:$0xff]
      %v211 = vld [vmem:[%s193 + $0x50] sm:$0xff]
      %v212 = vld [vmem:[%s193 + $0x58] sm:$0xff]
      %v213 = vld [vmem:[%s193 + $0x60] sm:$0xff]
      %v214 = vld [vmem:[%s193 + $0x68] sm:$0xff]
      %v215 = vld [vmem:[%s193 + $0x70] sm:$0xff]
      %v216 = vld [vmem:[%s193 + $0x78] sm:$0xff]
      %v217 = vld [vmem:[%s193 + $0x80] sm:$0xff]
      %v218 = vld [vmem:[%s193 + $0x88] sm:$0xff]
      %v219 = vld [vmem:[%s193 + $0x90] sm:$0xff]
      %v220 = vld [vmem:[%s193 + $0x98] sm:$0xff]
      %v221 = vld [vmem:[%s193 + $0xa0] sm:$0xff]
      %v222 = vld [vmem:[%s193 + $0xa8] sm:$0xff]
      %v223 = vld [vmem:[%s193 + $0xb0] sm:$0xff]
      %v224 = vld [vmem:[%s193 + $0xb8] sm:$0xff]
      %v225 = vld [vmem:[%s193 + $0xc0] sm:$0xff]
      %v226 = vld [vmem:[%s193 + $0xc8] sm:$0xff]
      %v227 = vld [vmem:[%s193 + $0xd0] sm:$0xff]
      %v228 = vld [vmem:[%s193 + $0xd8] sm:$0xff]
      %v229 = vld [vmem:[%s193 + $0xe0] sm:$0xff]
      %v230 = vld [vmem:[%s193 + $0xe8] sm:$0xff]
      %v231 = vld [vmem:[%s193 + $0xf0] sm:$0xff]
      %v232 = vld [vmem:[%s193 + $0xf8] sm:$0xff]
      %v233 = vld [vmem:[%s193 + $0x100] sm:$0xff]
      %v234 = vld [vmem:[%s193 + $0x108] sm:$0xff]
      %v235 = vld [vmem:[%s193 + $0x110] sm:$0xff]
      %v236 = vld [vmem:[%s193 + $0x118] sm:$0xff]
      %v237 = vld [vmem:[%s193 + $0x120] sm:$0xff]
      %v238 = vld [vmem:[%s193 + $0x128] sm:$0xff]
      %v239 = vld [vmem:[%s193 + $0x130] sm:$0xff]
      %v240 = vld [vmem:[%s193 + $0x138] sm:$0xff]
      %v241 = vld [vmem:[%s193 + $0x140] sm:$0xff]
      %v242 = vld [vmem:[%s193 + $0x148] sm:$0xff]
      %v243 = vld [vmem:[%s193 + $0x150] sm:$0xff]
      %v244 = vld [vmem:[%s193 + $0x158] sm:$0xff]
      %v245 = vld [vmem:[%s193 + $0x160] sm:$0xff]
      %v246 = vld [vmem:[%s193 + $0x168] sm:$0xff]
      %v247 = vld [vmem:[%s193 + $0x170] sm:$0xff]
      %v248 = vld [vmem:[%s193 + $0x178] sm:$0xff]
      %v249 = vld [vmem:[%s193 + $0x180] sm:$0xff]
      %v250 = vld [vmem:[%s193 + $0x188] sm:$0xff]
      %v251 = vld [vmem:[%s193 + $0x190] sm:$0xff]
      %v252 = vld [vmem:[%s193 + $0x198] sm:$0xff]
      %v253 = vld [vmem:[%s193 + $0x1a0] sm:$0xff]
      %v254 = vld [vmem:[%s193 + $0x1a8] sm:$0xff]
      %v255 = vld [vmem:[%s193 + $0x1b0] sm:$0xff]
      %v256 = vld [vmem:[%s193 + $0x1b8] sm:$0xff]
      %v257 = vld [vmem:[%s193 + $0x1c0] sm:$0xff]
      %v258 = vld [vmem:[%s193 + $0x1c8] sm:$0xff]
      %v259 = vld [vmem:[%s193 + $0x1d0] sm:$0xff]
      %v260 = vld [vmem:[%s193 + $0x1d8] sm:$0xff]
      %v261 = vld [vmem:[%s193 + $0x1e0] sm:$0xff]
      %v262 = vld [vmem:[%s193 + $0x1e8] sm:$0xff]
      %v263 = vld [vmem:[%s193 + $0x1f0] sm:$0xff]
      %v264 = vld [vmem:[%s193 + $0x1f8] sm:$0xff]
      %v265 = vld [vmem:[%s1] sm:$0xf]
      %v266 = vld [vmem:[%s2] sm:$0x1]
      %v268 = vlaneseq
      %v269 = vshrl.u32 %v268, 7
      %v270 = vsub.s32 0, %v269
      %v271 = vrot.slane %v266, %v270
      %vm273 = vcmask 31744
      %v275 = vsel %vm273, %v201, 0
      %v278 = vsel %vm273, %v202, 0
      %v281 = vsel %vm273, %v203, 0
      %v284 = vsel %vm273, %v204, 0
      %v287 = vsel %vm273, %v205, 0
      %v290 = vsel %vm273, %v206, 0
      %v293 = vsel %vm273, %v207, 0
      %v296 = vsel %vm273, %v208, 0
      %v299 = vsel %vm273, %v209, 0
      %v302 = vsel %vm273, %v210, 0
      %v305 = vsel %vm273, %v211, 0
      %v308 = vsel %vm273, %v212, 0
      %v311 = vsel %vm273, %v213, 0
      %v314 = vsel %vm273, %v214, 0
      %v317 = vsel %vm273, %v215, 0
      %v320 = vsel %vm273, %v216, 0
      %v323 = vsel %vm273, %v217, 0
      %v326 = vsel %vm273, %v218, 0
      %v329 = vsel %vm273, %v219, 0
      %v332 = vsel %vm273, %v220, 0
      %v335 = vsel %vm273, %v221, 0
      %v338 = vsel %vm273, %v222, 0
      %v341 = vsel %vm273, %v223, 0
      %v344 = vsel %vm273, %v224, 0
      %v347 = vsel %vm273, %v225, 0
      %v350 = vsel %vm273, %v226, 0
      %v353 = vsel %vm273, %v227, 0
      %v356 = vsel %vm273, %v228, 0
      %v359 = vsel %vm273, %v229, 0
      %v362 = vsel %vm273, %v230, 0
      %v365 = vsel %vm273, %v231, 0
      %v368 = vsel %vm273, %v232, 0
      %v371 = vsel %vm273, %v233, 0
      %v374 = vsel %vm273, %v234, 0
      %v377 = vsel %vm273, %v235, 0
      %v380 = vsel %vm273, %v236, 0
      %v383 = vsel %vm273, %v237, 0
      %v386 = vsel %vm273, %v238, 0
      %v389 = vsel %vm273, %v239, 0
      %v392 = vsel %vm273, %v240, 0
      %v395 = vsel %vm273, %v241, 0
      %v398 = vsel %vm273, %v242, 0
      %v401 = vsel %vm273, %v243, 0
      %v404 = vsel %vm273, %v244, 0
      %v407 = vsel %vm273, %v245, 0
      %v410 = vsel %vm273, %v246, 0
      %v413 = vsel %vm273, %v247, 0
      %v416 = vsel %vm273, %v248, 0
      %v419 = vsel %vm273, %v249, 0
      %v422 = vsel %vm273, %v250, 0
      %v425 = vsel %vm273, %v251, 0
      %v428 = vsel %vm273, %v252, 0
      %v431 = vsel %vm273, %v253, 0
      %v434 = vsel %vm273, %v254, 0
      %v437 = vsel %vm273, %v255, 0
      %v440 = vsel %vm273, %v256, 0
      %v443 = vsel %vm273, %v257, 0
      %v446 = vsel %vm273, %v258, 0
      %v449 = vsel %vm273, %v259, 0
      %v452 = vsel %vm273, %v260, 0
      %v455 = vsel %vm273, %v261, 0
      %v458 = vsel %vm273, %v262, 0
      %v461 = vsel %vm273, %v263, 0
      %v464 = vsel %vm273, %v264, 0
      %vm466 = vcmask 1043456
      %v468 = vsel %vm466, %v265, 0
      %470 = vmatprep.subr.mxu0 0.0
      %471 = vmatpush1.msra.mxu0 0.0
      %472 = vmatprep.subr.mxu0 0.0
      %473 = vmatpush1.msra.mxu0 0.0
      %474 = vmatprep.subr.mxu0 0.0
      %475 = vmatpush1.msra.mxu0 0.0
      %476 = vmatprep.subr.mxu0 0.0
      %477 = vmatpush1.msra.mxu0 0.0
      %478 = vmatprep.subr.mxu0 0.0
      %479 = vmatpush1.msra.mxu0 0.0
      %480 = vmatprep.subr.mxu0 0.0
      %481 = vmatpush1.msra.mxu0 0.0
      %482 = vmatprep.subr.mxu0 0.0
      %483 = vmatpush1.msra.mxu0 0.0
      %484 = vmatprep.subr.mxu0 0.0
      %485 = vmatpush1.msra.mxu0 0.0
      %486 = vmatprep.subr.mxu0 0.0
      %487 = vmatpush1.msra.mxu0 0.0
      %488 = vmatprep.subr.mxu0 0.0
      %489 = vmatpush1.msra.mxu0 0.0
      %490 = vmatprep.subr.mxu0 0.0
      %491 = vmatpush1.msra.mxu0 0.0
      %492 = vmatprep.subr.mxu0 0.0
      %493 = vmatpush1.msra.mxu0 0.0
      %494 = vmatprep.subr.mxu0 0.0
      %495 = vmatpush1.msra.mxu0 0.0
      %496 = vmatprep.subr.mxu0 0.0
      %497 = vmatpush1.msra.mxu0 0.0
      %498 = vmatprep.subr.mxu0 0.0
      %499 = vmatpush1.msra.mxu0 0.0
      %500 = vmatprep.subr.mxu0 0.0
      %501 = vmatpush1.msra.mxu0 %v468
      %502 = vmatprep.subr.mxu0 0.0
      %503 = vmatpush2.msra.mxu0 0.0
      %504 = vmatprep.subr.mxu0 0.0
      %505 = vmatpush2.msra.mxu0 0.0
      %506 = vmatprep.subr.mxu0 0.0
      %507 = vmatpush2.msra.mxu0 0.0
      %508 = vmatprep.subr.mxu0 0.0
      %509 = vmatpush2.msra.mxu0 0.0
      %510 = vmatprep.subr.mxu0 0.0
      %511 = vmatpush2.msra.mxu0 0.0
      %512 = vmatprep.subr.mxu0 0.0
      %513 = vmatpush2.msra.mxu0 0.0
      %514 = vmatprep.subr.mxu0 0.0
      %515 = vmatpush2.msra.mxu0 0.0
      %516 = vmatprep.subr.mxu0 0.0
      %517 = vmatpush2.msra.mxu0 0.0
      %518 = vmatprep.subr.mxu0 0.0
      %519 = vmatpush2.msra.mxu0 0.0
      %520 = vmatprep.subr.mxu0 0.0
      %521 = vmatpush2.msra.mxu0 0.0
      %522 = vmatprep.subr.mxu0 0.0
      %523 = vmatpush2.msra.mxu0 0.0
      %524 = vmatprep.subr.mxu0 0.0
      %525 = vmatpush2.msra.mxu0 0.0
      %526 = vmatprep.subr.mxu0 0.0
      %527 = vmatpush2.msra.mxu0 0.0
      %528 = vmatprep.subr.mxu0 0.0
      %529 = vmatpush2.msra.mxu0 0.0
      %530 = vmatprep.subr.mxu0 0.0
      %531 = vmatpush2.msra.mxu0 0.0
      %532 = vmatprep.subr.mxu0 0.0
      %533 = vmatpush2.msra.mxu0 0.0
      %534 = vmatprep.mubr.f32.mxu0 0.0
      %535 = vmatmul.mubr.f32.gmra.mxu0 %v275
      %v536 = vpop.f32.mrf.mxu0
      %v537 = vadd.f32 %v271, %v536
      %v538 = vpop.f32.mrf.mxu0
      %539 = vmatprep.mubr.f32.mxu0 0.0
      %540 = vmatmul.mubr.f32.gmra.mxu0 %v278
      %v541 = vpop.f32.mrf.mxu0
      %v542 = vadd.f32 %v271, %v541
      %v543 = vpop.f32.mrf.mxu0
      %544 = vmatprep.mubr.f32.mxu0 0.0
      %545 = vmatmul.mubr.f32.gmra.mxu0 %v281
      %v546 = vpop.f32.mrf.mxu0
      %v547 = vadd.f32 %v271, %v546
      %v548 = vpop.f32.mrf.mxu0
      %549 = vmatprep.mubr.f32.mxu0 0.0
      %550 = vmatmul.mubr.f32.gmra.mxu0 %v284
      %v551 = vpop.f32.mrf.mxu0
      %v552 = vadd.f32 %v271, %v551
      %v553 = vpop.f32.mrf.mxu0
      %554 = vmatprep.mubr.f32.mxu0 0.0
      %555 = vmatmul.mubr.f32.gmra.mxu0 %v287
      %v556 = vpop.f32.mrf.mxu0
      %v557 = vadd.f32 %v271, %v556
      %v558 = vpop.f32.mrf.mxu0
      %559 = vmatprep.mubr.f32.mxu0 0.0
      %560 = vmatmul.mubr.f32.gmra.mxu0 %v290
      %v561 = vpop.f32.mrf.mxu0
      %v562 = vadd.f32 %v271, %v561
      %v563 = vpop.f32.mrf.mxu0
      %564 = vmatprep.mubr.f32.mxu0 0.0
      %565 = vmatmul.mubr.f32.gmra.mxu0 %v293
      %v566 = vpop.f32.mrf.mxu0
      %v567 = vadd.f32 %v271, %v566
      %v568 = vpop.f32.mrf.mxu0
      %569 = vmatprep.mubr.f32.mxu0 0.0
      %570 = vmatmul.mubr.f32.gmra.mxu0 %v296
      %v571 = vpop.f32.mrf.mxu0
      %v572 = vadd.f32 %v271, %v571
      %v573 = vpop.f32.mrf.mxu0
      %574 = vmatprep.mubr.f32.mxu0 0.0
      %575 = vmatmul.mubr.f32.gmra.mxu0 %v299
      %v576 = vpop.f32.mrf.mxu0
      %v577 = vadd.f32 %v271, %v576
      %v578 = vpop.f32.mrf.mxu0
      %579 = vmatprep.mubr.f32.mxu0 0.0
      %580 = vmatmul.mubr.f32.gmra.mxu0 %v302
      %v581 = vpop.f32.mrf.mxu0
      %v582 = vadd.f32 %v271, %v581
      %v583 = vpop.f32.mrf.mxu0
      %584 = vmatprep.mubr.f32.mxu0 0.0
      %585 = vmatmul.mubr.f32.gmra.mxu0 %v305
      %v586 = vpop.f32.mrf.mxu0
      %v587 = vadd.f32 %v271, %v586
      %v588 = vpop.f32.mrf.mxu0
      %589 = vmatprep.mubr.f32.mxu0 0.0
      %590 = vmatmul.mubr.f32.gmra.mxu0 %v308
      %v591 = vpop.f32.mrf.mxu0
      %v592 = vadd.f32 %v271, %v591
      %v593 = vpop.f32.mrf.mxu0
      %594 = vmatprep.mubr.f32.mxu0 0.0
      %595 = vmatmul.mubr.f32.gmra.mxu0 %v311
      %v596 = vpop.f32.mrf.mxu0
      %v597 = vadd.f32 %v271, %v596
      %v598 = vpop.f32.mrf.mxu0
      %599 = vmatprep.mubr.f32.mxu0 0.0
      %600 = vmatmul.mubr.f32.gmra.mxu0 %v314
      %v601 = vpop.f32.mrf.mxu0
      %v602 = vadd.f32 %v271, %v601
      %v603 = vpop.f32.mrf.mxu0
      %604 = vmatprep.mubr.f32.mxu0 0.0
      %605 = vmatmul.mubr.f32.gmra.mxu0 %v317
      %v606 = vpop.f32.mrf.mxu0
      %v607 = vadd.f32 %v271, %v606
      %v608 = vpop.f32.mrf.mxu0
      %609 = vmatprep.mubr.f32.mxu0 0.0
      %610 = vmatmul.mubr.f32.gmra.mxu0 %v320
      %v611 = vpop.f32.mrf.mxu0
      %v612 = vadd.f32 %v271, %v611
      %v613 = vpop.f32.mrf.mxu0
      %614 = vmatprep.mubr.f32.mxu0 0.0
      %615 = vmatmul.mubr.f32.gmra.mxu0 %v323
      %v616 = vpop.f32.mrf.mxu0
      %v617 = vadd.f32 %v271, %v616
      %v618 = vpop.f32.mrf.mxu0
      %619 = vmatprep.mubr.f32.mxu0 0.0
      %620 = vmatmul.mubr.f32.gmra.mxu0 %v326
      %v621 = vpop.f32.mrf.mxu0
      %v622 = vadd.f32 %v271, %v621
      %v623 = vpop.f32.mrf.mxu0
      %624 = vmatprep.mubr.f32.mxu0 0.0
      %625 = vmatmul.mubr.f32.gmra.mxu0 %v329
      %v626 = vpop.f32.mrf.mxu0
      %v627 = vadd.f32 %v271, %v626
      %v628 = vpop.f32.mrf.mxu0
      %629 = vmatprep.mubr.f32.mxu0 0.0
      %630 = vmatmul.mubr.f32.gmra.mxu0 %v332
      %v631 = vpop.f32.mrf.mxu0
      %v632 = vadd.f32 %v271, %v631
      %v633 = vpop.f32.mrf.mxu0
      %634 = vmatprep.mubr.f32.mxu0 0.0
      %635 = vmatmul.mubr.f32.gmra.mxu0 %v335
      %v636 = vpop.f32.mrf.mxu0
      %v637 = vadd.f32 %v271, %v636
      %v638 = vpop.f32.mrf.mxu0
      %639 = vmatprep.mubr.f32.mxu0 0.0
      %640 = vmatmul.mubr.f32.gmra.mxu0 %v338
      %v641 = vpop.f32.mrf.mxu0
      %v642 = vadd.f32 %v271, %v641
      %v643 = vpop.f32.mrf.mxu0
      %644 = vmatprep.mubr.f32.mxu0 0.0
      %645 = vmatmul.mubr.f32.gmra.mxu0 %v341
      %v646 = vpop.f32.mrf.mxu0
      %v647 = vadd.f32 %v271, %v646
      %v648 = vpop.f32.mrf.mxu0
      %649 = vmatprep.mubr.f32.mxu0 0.0
      %650 = vmatmul.mubr.f32.gmra.mxu0 %v344
      %v651 = vpop.f32.mrf.mxu0
      %v652 = vadd.f32 %v271, %v651
      %v653 = vpop.f32.mrf.mxu0
      %654 = vmatprep.mubr.f32.mxu0 0.0
      %655 = vmatmul.mubr.f32.gmra.mxu0 %v347
      %v656 = vpop.f32.mrf.mxu0
      %v657 = vadd.f32 %v271, %v656
      %v658 = vpop.f32.mrf.mxu0
      %659 = vmatprep.mubr.f32.mxu0 0.0
      %660 = vmatmul.mubr.f32.gmra.mxu0 %v350
      %v661 = vpop.f32.mrf.mxu0
      %v662 = vadd.f32 %v271, %v661
      %v663 = vpop.f32.mrf.mxu0
      %664 = vmatprep.mubr.f32.mxu0 0.0
      %665 = vmatmul.mubr.f32.gmra.mxu0 %v353
      %v666 = vpop.f32.mrf.mxu0
      %v667 = vadd.f32 %v271, %v666
      %v668 = vpop.f32.mrf.mxu0
      %669 = vmatprep.mubr.f32.mxu0 0.0
      %670 = vmatmul.mubr.f32.gmra.mxu0 %v356
      %v671 = vpop.f32.mrf.mxu0
      %v672 = vadd.f32 %v271, %v671
      %v673 = vpop.f32.mrf.mxu0
      %674 = vmatprep.mubr.f32.mxu0 0.0
      %675 = vmatmul.mubr.f32.gmra.mxu0 %v359
      %v676 = vpop.f32.mrf.mxu0
      %v677 = vadd.f32 %v271, %v676
      %v678 = vpop.f32.mrf.mxu0
      %679 = vmatprep.mubr.f32.mxu0 0.0
      %680 = vmatmul.mubr.f32.gmra.mxu0 %v362
      %v681 = vpop.f32.mrf.mxu0
      %v682 = vadd.f32 %v271, %v681
      %v683 = vpop.f32.mrf.mxu0
      %684 = vmatprep.mubr.f32.mxu0 0.0
      %685 = vmatmul.mubr.f32.gmra.mxu0 %v365
      %v686 = vpop.f32.mrf.mxu0
      %v687 = vadd.f32 %v271, %v686
      %v688 = vpop.f32.mrf.mxu0
      %689 = vmatprep.mubr.f32.mxu0 0.0
      %690 = vmatmul.mubr.f32.gmra.mxu0 %v368
      %v691 = vpop.f32.mrf.mxu0
      %v692 = vadd.f32 %v271, %v691
      %v693 = vpop.f32.mrf.mxu0
      %694 = vmatprep.mubr.f32.mxu0 0.0
      %695 = vmatmul.mubr.f32.gmra.mxu0 %v371
      %v696 = vpop.f32.mrf.mxu0
      %v697 = vadd.f32 %v271, %v696
      %v698 = vpop.f32.mrf.mxu0
      %699 = vmatprep.mubr.f32.mxu0 0.0
      %700 = vmatmul.mubr.f32.gmra.mxu0 %v374
      %v701 = vpop.f32.mrf.mxu0
      %v702 = vadd.f32 %v271, %v701
      %v703 = vpop.f32.mrf.mxu0
      %704 = vmatprep.mubr.f32.mxu0 0.0
      %705 = vmatmul.mubr.f32.gmra.mxu0 %v377
      %v706 = vpop.f32.mrf.mxu0
      %v707 = vadd.f32 %v271, %v706
      %v708 = vpop.f32.mrf.mxu0
      %709 = vmatprep.mubr.f32.mxu0 0.0
      %710 = vmatmul.mubr.f32.gmra.mxu0 %v380
      %v711 = vpop.f32.mrf.mxu0
      %v712 = vadd.f32 %v271, %v711
      %v713 = vpop.f32.mrf.mxu0
      %714 = vmatprep.mubr.f32.mxu0 0.0
      %715 = vmatmul.mubr.f32.gmra.mxu0 %v383
      %v716 = vpop.f32.mrf.mxu0
      %v717 = vadd.f32 %v271, %v716
      %v718 = vpop.f32.mrf.mxu0
      %719 = vmatprep.mubr.f32.mxu0 0.0
      %720 = vmatmul.mubr.f32.gmra.mxu0 %v386
      %v721 = vpop.f32.mrf.mxu0
      %v722 = vadd.f32 %v271, %v721
      %v723 = vpop.f32.mrf.mxu0
      %724 = vmatprep.mubr.f32.mxu0 0.0
      %725 = vmatmul.mubr.f32.gmra.mxu0 %v389
      %v726 = vpop.f32.mrf.mxu0
      %v727 = vadd.f32 %v271, %v726
      %v728 = vpop.f32.mrf.mxu0
      %729 = vmatprep.mubr.f32.mxu0 0.0
      %730 = vmatmul.mubr.f32.gmra.mxu0 %v392
      %v731 = vpop.f32.mrf.mxu0
      %v732 = vadd.f32 %v271, %v731
      %v733 = vpop.f32.mrf.mxu0
      %734 = vmatprep.mubr.f32.mxu0 0.0
      %735 = vmatmul.mubr.f32.gmra.mxu0 %v395
      %v736 = vpop.f32.mrf.mxu0
      %v737 = vadd.f32 %v271, %v736
      %v738 = vpop.f32.mrf.mxu0
      %739 = vmatprep.mubr.f32.mxu0 0.0
      %740 = vmatmul.mubr.f32.gmra.mxu0 %v398
      %v741 = vpop.f32.mrf.mxu0
      %v742 = vadd.f32 %v271, %v741
      %v743 = vpop.f32.mrf.mxu0
      %744 = vmatprep.mubr.f32.mxu0 0.0
      %745 = vmatmul.mubr.f32.gmra.mxu0 %v401
      %v746 = vpop.f32.mrf.mxu0
      %v747 = vadd.f32 %v271, %v746
      %v748 = vpop.f32.mrf.mxu0
      %749 = vmatprep.mubr.f32.mxu0 0.0
      %750 = vmatmul.mubr.f32.gmra.mxu0 %v404
      %v751 = vpop.f32.mrf.mxu0
      %v752 = vadd.f32 %v271, %v751
      %v753 = vpop.f32.mrf.mxu0
      %754 = vmatprep.mubr.f32.mxu0 0.0
      %755 = vmatmul.mubr.f32.gmra.mxu0 %v407
      %v756 = vpop.f32.mrf.mxu0
      %v757 = vadd.f32 %v271, %v756
      %v758 = vpop.f32.mrf.mxu0
      %759 = vmatprep.mubr.f32.mxu0 0.0
      %760 = vmatmul.mubr.f32.gmra.mxu0 %v410
      %v761 = vpop.f32.mrf.mxu0
      %v762 = vadd.f32 %v271, %v761
      %v763 = vpop.f32.mrf.mxu0
      %764 = vmatprep.mubr.f32.mxu0 0.0
      %765 = vmatmul.mubr.f32.gmra.mxu0 %v413
      %v766 = vpop.f32.mrf.mxu0
      %v767 = vadd.f32 %v271, %v766
      %v768 = vpop.f32.mrf.mxu0
      %769 = vmatprep.mubr.f32.mxu0 0.0
      %770 = vmatmul.mubr.f32.gmra.mxu0 %v416
      %v771 = vpop.f32.mrf.mxu0
      %v772 = vadd.f32 %v271, %v771
      %v773 = vpop.f32.mrf.mxu0
      %774 = vmatprep.mubr.f32.mxu0 0.0
      %775 = vmatmul.mubr.f32.gmra.mxu0 %v419
      %v776 = vpop.f32.mrf.mxu0
      %v777 = vadd.f32 %v271, %v776
      %v778 = vpop.f32.mrf.mxu0
      %779 = vmatprep.mubr.f32.mxu0 0.0
      %780 = vmatmul.mubr.f32.gmra.mxu0 %v422
      %v781 = vpop.f32.mrf.mxu0
      %v782 = vadd.f32 %v271, %v781
      %v783 = vpop.f32.mrf.mxu0
      %784 = vmatprep.mubr.f32.mxu0 0.0
      %785 = vmatmul.mubr.f32.gmra.mxu0 %v425
      %v786 = vpop.f32.mrf.mxu0
      %v787 = vadd.f32 %v271, %v786
      %v788 = vpop.f32.mrf.mxu0
      %789 = vmatprep.mubr.f32.mxu0 0.0
      %790 = vmatmul.mubr.f32.gmra.mxu0 %v428
      %v791 = vpop.f32.mrf.mxu0
      %v792 = vadd.f32 %v271, %v791
      %v793 = vpop.f32.mrf.mxu0
      %794 = vmatprep.mubr.f32.mxu0 0.0
      %795 = vmatmul.mubr.f32.gmra.mxu0 %v431
      %v796 = vpop.f32.mrf.mxu0
      %v797 = vadd.f32 %v271, %v796
      %v798 = vpop.f32.mrf.mxu0
      %799 = vmatprep.mubr.f32.mxu0 0.0
      %800 = vmatmul.mubr.f32.gmra.mxu0 %v434
      %v801 = vpop.f32.mrf.mxu0
      %v802 = vadd.f32 %v271, %v801
      %v803 = vpop.f32.mrf.mxu0
      %804 = vmatprep.mubr.f32.mxu0 0.0
      %805 = vmatmul.mubr.f32.gmra.mxu0 %v437
      %v806 = vpop.f32.mrf.mxu0
      %v807 = vadd.f32 %v271, %v806
      %v808 = vpop.f32.mrf.mxu0
      %809 = vmatprep.mubr.f32.mxu0 0.0
      %810 = vmatmul.mubr.f32.gmra.mxu0 %v440
      %v811 = vpop.f32.mrf.mxu0
      %v812 = vadd.f32 %v271, %v811
      %v813 = vpop.f32.mrf.mxu0
      %814 = vmatprep.mubr.f32.mxu0 0.0
      %815 = vmatmul.mubr.f32.gmra.mxu0 %v443
      %v816 = vpop.f32.mrf.mxu0
      %v817 = vadd.f32 %v271, %v816
      %v818 = vpop.f32.mrf.mxu0
      %819 = vmatprep.mubr.f32.mxu0 0.0
      %820 = vmatmul.mubr.f32.gmra.mxu0 %v446
      %v821 = vpop.f32.mrf.mxu0
      %v822 = vadd.f32 %v271, %v821
      %v823 = vpop.f32.mrf.mxu0
      %824 = vmatprep.mubr.f32.mxu0 0.0
      %825 = vmatmul.mubr.f32.gmra.mxu0 %v449
      %v826 = vpop.f32.mrf.mxu0
      %v827 = vadd.f32 %v271, %v826
      %v828 = vpop.f32.mrf.mxu0
      %829 = vmatprep.mubr.f32.mxu0 0.0
      %830 = vmatmul.mubr.f32.gmra.mxu0 %v452
      %v831 = vpop.f32.mrf.mxu0
      %v832 = vadd.f32 %v271, %v831
      %v833 = vpop.f32.mrf.mxu0
      %834 = vmatprep.mubr.f32.mxu0 0.0
      %835 = vmatmul.mubr.f32.gmra.mxu0 %v455
      %v836 = vpop.f32.mrf.mxu0
      %v837 = vadd.f32 %v271, %v836
      %v838 = vpop.f32.mrf.mxu0
      %839 = vmatprep.mubr.f32.mxu0 0.0
      %840 = vmatmul.mubr.f32.gmra.mxu0 %v458
      %v841 = vpop.f32.mrf.mxu0
      %v842 = vadd.f32 %v271, %v841
      %v843 = vpop.f32.mrf.mxu0
      %844 = vmatprep.mubr.f32.mxu0 0.0
      %845 = vmatmul.mubr.f32.gmra.mxu0 %v461
      %v846 = vpop.f32.mrf.mxu0
      %v847 = vadd.f32 %v271, %v846
      %v848 = vpop.f32.mrf.mxu0
      %849 = vmatprep.mubr.f32.mxu0 0.0
      %850 = vmatmul.mubr.f32.gmra.mxu0 %v464
      %v851 = vpop.f32.mrf.mxu0
      %v852 = vadd.f32 %v271, %v851
      %v853 = vpop.f32.mrf.mxu0
      %854 = vdwg.mxu0
      %v855 = vmax.f32 %v537, 0.0
      %v856 = vmax.f32 %v542, 0.0
      %v857 = vmax.f32 %v547, 0.0
      %v858 = vmax.f32 %v552, 0.0
      %v859 = vmax.f32 %v557, 0.0
      %v860 = vmax.f32 %v562, 0.0
      %v861 = vmax.f32 %v567, 0.0
      %v862 = vmax.f32 %v572, 0.0
      %v863 = vmax.f32 %v577, 0.0
      %v864 = vmax.f32 %v582, 0.0
      %v865 = vmax.f32 %v587, 0.0
      %v866 = vmax.f32 %v592, 0.0
      %v867 = vmax.f32 %v597, 0.0
      %v868 = vmax.f32 %v602, 0.0
      %v869 = vmax.f32 %v607, 0.0
      %v870 = vmax.f32 %v612, 0.0
      %v871 = vmax.f32 %v617, 0.0
      %v872 = vmax.f32 %v622, 0.0
      %v873 = vmax.f32 %v627, 0.0
      %v874 = vmax.f32 %v632, 0.0
      %v875 = vmax.f32 %v637, 0.0
      %v876 = vmax.f32 %v642, 0.0
      %v877 = vmax.f32 %v647, 0.0
      %v878 = vmax.f32 %v652, 0.0
      %v879 = vmax.f32 %v657, 0.0
      %v880 = vmax.f32 %v662, 0.0
      %v881 = vmax.f32 %v667, 0.0
      %v882 = vmax.f32 %v672, 0.0
      %v883 = vmax.f32 %v677, 0.0
      %v884 = vmax.f32 %v682, 0.0
      %v885 = vmax.f32 %v687, 0.0
      %v886 = vmax.f32 %v692, 0.0
      %v887 = vmax.f32 %v697, 0.0
      %v888 = vmax.f32 %v702, 0.0
      %v889 = vmax.f32 %v707, 0.0
      %v890 = vmax.f32 %v712, 0.0
      %v891 = vmax.f32 %v717, 0.0
      %v892 = vmax.f32 %v722, 0.0
      %v893 = vmax.f32 %v727, 0.0
      %v894 = vmax.f32 %v732, 0.0
      %v895 = vmax.f32 %v737, 0.0
      %v896 = vmax.f32 %v742, 0.0
      %v897 = vmax.f32 %v747, 0.0
      %v898 = vmax.f32 %v752, 0.0
      %v899 = vmax.f32 %v757, 0.0
      %v900 = vmax.f32 %v762, 0.0
      %v901 = vmax.f32 %v767, 0.0
      %v902 = vmax.f32 %v772, 0.0
      %v903 = vmax.f32 %v777, 0.0
      %v904 = vmax.f32 %v782, 0.0
      %v905 = vmax.f32 %v787, 0.0
      %v906 = vmax.f32 %v792, 0.0
      %v907 = vmax.f32 %v797, 0.0
      %v908 = vmax.f32 %v802, 0.0
      %v909 = vmax.f32 %v807, 0.0
      %v910 = vmax.f32 %v812, 0.0
      %v911 = vmax.f32 %v817, 0.0
      %v912 = vmax.f32 %v822, 0.0
      %v913 = vmax.f32 %v827, 0.0
      %v914 = vmax.f32 %v832, 0.0
      %v915 = vmax.f32 %v837, 0.0
      %v916 = vmax.f32 %v842, 0.0
      %v917 = vmax.f32 %v847, 0.0
      %v918 = vmax.f32 %v852, 0.0
      %v919 = vld [vmem:[%s3] sm:$0xff]
      %v920 = vld [vmem:[%s3 + $0x8] sm:$0xff]
      %v921 = vld [vmem:[%s3 + $0x10] sm:$0xff]
      %v922 = vld [vmem:[%s3 + $0x18] sm:$0xff]
      %vm923 = vcmask 261120
      %v925 = vsel %vm923, %v855, 0
      %v928 = vsel %vm923, %v856, 0
      %v931 = vsel %vm923, %v857, 0
      %v934 = vsel %vm923, %v858, 0
      %v937 = vsel %vm923, %v859, 0
      %v940 = vsel %vm923, %v860, 0
      %v943 = vsel %vm923, %v861, 0
      %v946 = vsel %vm923, %v862, 0
      %v949 = vsel %vm923, %v863, 0
      %v952 = vsel %vm923, %v864, 0
      %v955 = vsel %vm923, %v865, 0
      %v958 = vsel %vm923, %v866, 0
      %v961 = vsel %vm923, %v867, 0
      %v964 = vsel %vm923, %v868, 0
      %v967 = vsel %vm923, %v869, 0
      %v970 = vsel %vm923, %v870, 0
      %v973 = vsel %vm923, %v871, 0
      %v976 = vsel %vm923, %v872, 0
      %v979 = vsel %vm923, %v873, 0
      %v982 = vsel %vm923, %v874, 0
      %v985 = vsel %vm923, %v875, 0
      %v988 = vsel %vm923, %v876, 0
      %v991 = vsel %vm923, %v877, 0
      %v994 = vsel %vm923, %v878, 0
      %v997 = vsel %vm923, %v879, 0
      %v1000 = vsel %vm923, %v880, 0
      %v1003 = vsel %vm923, %v881, 0
      %v1006 = vsel %vm923, %v882, 0
      %v1009 = vsel %vm923, %v883, 0
      %v1012 = vsel %vm923, %v884, 0
      %v1015 = vsel %vm923, %v885, 0
      %v1018 = vsel %vm923, %v886, 0
      %v1021 = vsel %vm923, %v887, 0
      %v1024 = vsel %vm923, %v888, 0
      %v1027 = vsel %vm923, %v889, 0
      %v1030 = vsel %vm923, %v890, 0
      %v1033 = vsel %vm923, %v891, 0
      %v1036 = vsel %vm923, %v892, 0
      %v1039 = vsel %vm923, %v893, 0
      %v1042 = vsel %vm923, %v894, 0
      %v1045 = vsel %vm923, %v895, 0
      %v1048 = vsel %vm923, %v896, 0
      %v1051 = vsel %vm923, %v897, 0
      %v1054 = vsel %vm923, %v898, 0
      %v1057 = vsel %vm923, %v899, 0
      %v1060 = vsel %vm923, %v900, 0
      %v1063 = vsel %vm923, %v901, 0
      %v1066 = vsel %vm923, %v902, 0
      %v1069 = vsel %vm923, %v903, 0
      %v1072 = vsel %vm923, %v904, 0
      %v1075 = vsel %vm923, %v905, 0
      %v1078 = vsel %vm923, %v906, 0
      %v1081 = vsel %vm923, %v907, 0
      %v1084 = vsel %vm923, %v908, 0
      %v1087 = vsel %vm923, %v909, 0
      %v1090 = vsel %vm923, %v910, 0
      %v1093 = vsel %vm923, %v911, 0
      %v1096 = vsel %vm923, %v912, 0
      %v1099 = vsel %vm923, %v913, 0
      %v1102 = vsel %vm923, %v914, 0
      %v1105 = vsel %vm923, %v915, 0
      %v1108 = vsel %vm923, %v916, 0
      %v1111 = vsel %vm923, %v917, 0
      %v1114 = vsel %vm923, %v918, 0
      %1116 = vmatprep.subr.mxu0 0.0
      %1117 = vmatpush1.msra.mxu0 0.0
      %1118 = vmatprep.subr.mxu0 0.0
      %1119 = vmatpush1.msra.mxu0 0.0
      %1120 = vmatprep.subr.mxu0 0.0
      %1121 = vmatpush1.msra.mxu0 0.0
      %1122 = vmatprep.subr.mxu0 0.0
      %1123 = vmatpush1.msra.mxu0 0.0
      %1124 = vmatprep.subr.mxu0 0.0
      %1125 = vmatpush1.msra.mxu0 0.0
      %1126 = vmatprep.subr.mxu0 0.0
      %1127 = vmatpush1.msra.mxu0 0.0
      %1128 = vmatprep.subr.mxu0 0.0
      %1129 = vmatpush1.msra.mxu0 0.0
      %1130 = vmatprep.subr.mxu0 0.0
      %1131 = vmatpush1.msra.mxu0 0.0
      %1132 = vmatprep.subr.mxu0 0.0
      %1133 = vmatpush1.msra.mxu0 0.0
      %1134 = vmatprep.subr.mxu0 0.0
      %1135 = vmatpush1.msra.mxu0 0.0
      %1136 = vmatprep.subr.mxu0 0.0
      %1137 = vmatpush1.msra.mxu0 0.0
      %1138 = vmatprep.subr.mxu0 0.0
      %1139 = vmatpush1.msra.mxu0 0.0
      %1140 = vmatprep.subr.mxu0 0.0
      %1141 = vmatpush1.msra.mxu0 %v922
      %1142 = vmatprep.subr.mxu0 0.0
      %1143 = vmatpush1.msra.mxu0 %v921
      %1144 = vmatprep.subr.mxu0 0.0
      %1145 = vmatpush1.msra.mxu0 %v920
      %1146 = vmatprep.subr.mxu0 0.0
      %1147 = vmatpush1.msra.mxu0 %v919
      %1148 = vmatprep.subr.mxu0 0.0
      %1149 = vmatpush2.msra.mxu0 0.0
      %1150 = vmatprep.subr.mxu0 0.0
      %1151 = vmatpush2.msra.mxu0 0.0
      %1152 = vmatprep.subr.mxu0 0.0
      %1153 = vmatpush2.msra.mxu0 0.0
      %1154 = vmatprep.subr.mxu0 0.0
      %1155 = vmatpush2.msra.mxu0 0.0
      %1156 = vmatprep.subr.mxu0 0.0
      %1157 = vmatpush2.msra.mxu0 0.0
      %1158 = vmatprep.subr.mxu0 0.0
      %1159 = vmatpush2.msra.mxu0 0.0
      %1160 = vmatprep.subr.mxu0 0.0
      %1161 = vmatpush2.msra.mxu0 0.0
      %1162 = vmatprep.subr.mxu0 0.0
      %1163 = vmatpush2.msra.mxu0 0.0
      %1164 = vmatprep.subr.mxu0 0.0
      %1165 = vmatpush2.msra.mxu0 0.0
      %1166 = vmatprep.subr.mxu0 0.0
      %1167 = vmatpush2.msra.mxu0 0.0
      %1168 = vmatprep.subr.mxu0 0.0
      %1169 = vmatpush2.msra.mxu0 0.0
      %1170 = vmatprep.subr.mxu0 0.0
      %1171 = vmatpush2.msra.mxu0 0.0
      %1172 = vmatprep.subr.mxu0 0.0
      %1173 = vmatpush2.msra.mxu0 0.0
      %1174 = vmatprep.subr.mxu0 0.0
      %1175 = vmatpush2.msra.mxu0 0.0
      %1176 = vmatprep.subr.mxu0 0.0
      %1177 = vmatpush2.msra.mxu0 0.0
      %1178 = vmatprep.subr.mxu0 0.0
      %1179 = vmatpush2.msra.mxu0 0.0
      %1180 = vmatprep.mubr.f32.mxu0 0.0
      %1181 = vmatmul.mubr.f32.gmra.mxu0 %v925
      %v1182 = vpop.f32.mrf.mxu0
      %v1183 = vadd.f32 0.0, %v1182
      %v1184 = vpop.f32.mrf.mxu0
      %1185 = vmatprep.mubr.f32.mxu0 0.0
      %1186 = vmatmul.mubr.f32.gmra.mxu0 %v928
      %v1187 = vpop.f32.mrf.mxu0
      %v1188 = vadd.f32 0.0, %v1187
      %v1189 = vpop.f32.mrf.mxu0
      %1190 = vmatprep.mubr.f32.mxu0 0.0
      %1191 = vmatmul.mubr.f32.gmra.mxu0 %v931
      %v1192 = vpop.f32.mrf.mxu0
      %v1193 = vadd.f32 0.0, %v1192
      %v1194 = vpop.f32.mrf.mxu0
      %1195 = vmatprep.mubr.f32.mxu0 0.0
      %1196 = vmatmul.mubr.f32.gmra.mxu0 %v934
      %v1197 = vpop.f32.mrf.mxu0
      %v1198 = vadd.f32 0.0, %v1197
      %v1199 = vpop.f32.mrf.mxu0
      %1200 = vmatprep.mubr.f32.mxu0 0.0
      %1201 = vmatmul.mubr.f32.gmra.mxu0 %v937
      %v1202 = vpop.f32.mrf.mxu0
      %v1203 = vadd.f32 0.0, %v1202
      %v1204 = vpop.f32.mrf.mxu0
      %1205 = vmatprep.mubr.f32.mxu0 0.0
      %1206 = vmatmul.mubr.f32.gmra.mxu0 %v940
      %v1207 = vpop.f32.mrf.mxu0
      %v1208 = vadd.f32 0.0, %v1207
      %v1209 = vpop.f32.mrf.mxu0
      %1210 = vmatprep.mubr.f32.mxu0 0.0
      %1211 = vmatmul.mubr.f32.gmra.mxu0 %v943
      %v1212 = vpop.f32.mrf.mxu0
      %v1213 = vadd.f32 0.0, %v1212
      %v1214 = vpop.f32.mrf.mxu0
      %1215 = vmatprep.mubr.f32.mxu0 0.0
      %1216 = vmatmul.mubr.f32.gmra.mxu0 %v946
      %v1217 = vpop.f32.mrf.mxu0
      %v1218 = vadd.f32 0.0, %v1217
      %v1219 = vpop.f32.mrf.mxu0
      %1220 = vmatprep.mubr.f32.mxu0 0.0
      %1221 = vmatmul.mubr.f32.gmra.mxu0 %v949
      %v1222 = vpop.f32.mrf.mxu0
      %v1223 = vadd.f32 0.0, %v1222
      %v1224 = vpop.f32.mrf.mxu0
      %1225 = vmatprep.mubr.f32.mxu0 0.0
      %1226 = vmatmul.mubr.f32.gmra.mxu0 %v952
      %v1227 = vpop.f32.mrf.mxu0
      %v1228 = vadd.f32 0.0, %v1227
      %v1229 = vpop.f32.mrf.mxu0
      %1230 = vmatprep.mubr.f32.mxu0 0.0
      %1231 = vmatmul.mubr.f32.gmra.mxu0 %v955
      %v1232 = vpop.f32.mrf.mxu0
      %v1233 = vadd.f32 0.0, %v1232
      %v1234 = vpop.f32.mrf.mxu0
      %1235 = vmatprep.mubr.f32.mxu0 0.0
      %1236 = vmatmul.mubr.f32.gmra.mxu0 %v958
      %v1237 = vpop.f32.mrf.mxu0
      %v1238 = vadd.f32 0.0, %v1237
      %v1239 = vpop.f32.mrf.mxu0
      %1240 = vmatprep.mubr.f32.mxu0 0.0
      %1241 = vmatmul.mubr.f32.gmra.mxu0 %v961
      %v1242 = vpop.f32.mrf.mxu0
      %v1243 = vadd.f32 0.0, %v1242
      %v1244 = vpop.f32.mrf.mxu0
      %1245 = vmatprep.mubr.f32.mxu0 0.0
      %1246 = vmatmul.mubr.f32.gmra.mxu0 %v964
      %v1247 = vpop.f32.mrf.mxu0
      %v1248 = vadd.f32 0.0, %v1247
      %v1249 = vpop.f32.mrf.mxu0
      %1250 = vmatprep.mubr.f32.mxu0 0.0
      %1251 = vmatmul.mubr.f32.gmra.mxu0 %v967
      %v1252 = vpop.f32.mrf.mxu0
      %v1253 = vadd.f32 0.0, %v1252
      %v1254 = vpop.f32.mrf.mxu0
      %1255 = vmatprep.mubr.f32.mxu0 0.0
      %1256 = vmatmul.mubr.f32.gmra.mxu0 %v970
      %v1257 = vpop.f32.mrf.mxu0
      %v1258 = vadd.f32 0.0, %v1257
      %v1259 = vpop.f32.mrf.mxu0
      %1260 = vmatprep.mubr.f32.mxu0 0.0
      %1261 = vmatmul.mubr.f32.gmra.mxu0 %v973
      %v1262 = vpop.f32.mrf.mxu0
      %v1263 = vadd.f32 0.0, %v1262
      %v1264 = vpop.f32.mrf.mxu0
      %1265 = vmatprep.mubr.f32.mxu0 0.0
      %1266 = vmatmul.mubr.f32.gmra.mxu0 %v976
      %v1267 = vpop.f32.mrf.mxu0
      %v1268 = vadd.f32 0.0, %v1267
      %v1269 = vpop.f32.mrf.mxu0
      %1270 = vmatprep.mubr.f32.mxu0 0.0
      %1271 = vmatmul.mubr.f32.gmra.mxu0 %v979
      %v1272 = vpop.f32.mrf.mxu0
      %v1273 = vadd.f32 0.0, %v1272
      %v1274 = vpop.f32.mrf.mxu0
      %1275 = vmatprep.mubr.f32.mxu0 0.0
      %1276 = vmatmul.mubr.f32.gmra.mxu0 %v982
      %v1277 = vpop.f32.mrf.mxu0
      %v1278 = vadd.f32 0.0, %v1277
      %v1279 = vpop.f32.mrf.mxu0
      %1280 = vmatprep.mubr.f32.mxu0 0.0
      %1281 = vmatmul.mubr.f32.gmra.mxu0 %v985
      %v1282 = vpop.f32.mrf.mxu0
      %v1283 = vadd.f32 0.0, %v1282
      %v1284 = vpop.f32.mrf.mxu0
      %1285 = vmatprep.mubr.f32.mxu0 0.0
      %1286 = vmatmul.mubr.f32.gmra.mxu0 %v988
      %v1287 = vpop.f32.mrf.mxu0
      %v1288 = vadd.f32 0.0, %v1287
      %v1289 = vpop.f32.mrf.mxu0
      %1290 = vmatprep.mubr.f32.mxu0 0.0
      %1291 = vmatmul.mubr.f32.gmra.mxu0 %v991
      %v1292 = vpop.f32.mrf.mxu0
      %v1293 = vadd.f32 0.0, %v1292
      %v1294 = vpop.f32.mrf.mxu0
      %1295 = vmatprep.mubr.f32.mxu0 0.0
      %1296 = vmatmul.mubr.f32.gmra.mxu0 %v994
      %v1297 = vpop.f32.mrf.mxu0
      %v1298 = vadd.f32 0.0, %v1297
      %v1299 = vpop.f32.mrf.mxu0
      %1300 = vmatprep.mubr.f32.mxu0 0.0
      %1301 = vmatmul.mubr.f32.gmra.mxu0 %v997
      %v1302 = vpop.f32.mrf.mxu0
      %v1303 = vadd.f32 0.0, %v1302
      %v1304 = vpop.f32.mrf.mxu0
      %1305 = vmatprep.mubr.f32.mxu0 0.0
      %1306 = vmatmul.mubr.f32.gmra.mxu0 %v1000
      %v1307 = vpop.f32.mrf.mxu0
      %v1308 = vadd.f32 0.0, %v1307
      %v1309 = vpop.f32.mrf.mxu0
      %1310 = vmatprep.mubr.f32.mxu0 0.0
      %1311 = vmatmul.mubr.f32.gmra.mxu0 %v1003
      %v1312 = vpop.f32.mrf.mxu0
      %v1313 = vadd.f32 0.0, %v1312
      %v1314 = vpop.f32.mrf.mxu0
      %1315 = vmatprep.mubr.f32.mxu0 0.0
      %1316 = vmatmul.mubr.f32.gmra.mxu0 %v1006
      %v1317 = vpop.f32.mrf.mxu0
      %v1318 = vadd.f32 0.0, %v1317
      %v1319 = vpop.f32.mrf.mxu0
      %1320 = vmatprep.mubr.f32.mxu0 0.0
      %1321 = vmatmul.mubr.f32.gmra.mxu0 %v1009
      %v1322 = vpop.f32.mrf.mxu0
      %v1323 = vadd.f32 0.0, %v1322
      %v1324 = vpop.f32.mrf.mxu0
      %1325 = vmatprep.mubr.f32.mxu0 0.0
      %1326 = vmatmul.mubr.f32.gmra.mxu0 %v1012
      %v1327 = vpop.f32.mrf.mxu0
      %v1328 = vadd.f32 0.0, %v1327
      %v1329 = vpop.f32.mrf.mxu0
      %1330 = vmatprep.mubr.f32.mxu0 0.0
      %1331 = vmatmul.mubr.f32.gmra.mxu0 %v1015
      %v1332 = vpop.f32.mrf.mxu0
      %v1333 = vadd.f32 0.0, %v1332
      %v1334 = vpop.f32.mrf.mxu0
      %1335 = vmatprep.mubr.f32.mxu0 0.0
      %1336 = vmatmul.mubr.f32.gmra.mxu0 %v1018
      %v1337 = vpop.f32.mrf.mxu0
      %v1338 = vadd.f32 0.0, %v1337
      %v1339 = vpop.f32.mrf.mxu0
      %1340 = vmatprep.mubr.f32.mxu0 0.0
      %1341 = vmatmul.mubr.f32.gmra.mxu0 %v1021
      %v1342 = vpop.f32.mrf.mxu0
      %v1343 = vadd.f32 0.0, %v1342
      %v1344 = vpop.f32.mrf.mxu0
      %1345 = vmatprep.mubr.f32.mxu0 0.0
      %1346 = vmatmul.mubr.f32.gmra.mxu0 %v1024
      %v1347 = vpop.f32.mrf.mxu0
      %v1348 = vadd.f32 0.0, %v1347
      %v1349 = vpop.f32.mrf.mxu0
      %1350 = vmatprep.mubr.f32.mxu0 0.0
      %1351 = vmatmul.mubr.f32.gmra.mxu0 %v1027
      %v1352 = vpop.f32.mrf.mxu0
      %v1353 = vadd.f32 0.0, %v1352
      %v1354 = vpop.f32.mrf.mxu0
      %1355 = vmatprep.mubr.f32.mxu0 0.0
      %1356 = vmatmul.mubr.f32.gmra.mxu0 %v1030
      %v1357 = vpop.f32.mrf.mxu0
      %v1358 = vadd.f32 0.0, %v1357
      %v1359 = vpop.f32.mrf.mxu0
      %1360 = vmatprep.mubr.f32.mxu0 0.0
      %1361 = vmatmul.mubr.f32.gmra.mxu0 %v1033
      %v1362 = vpop.f32.mrf.mxu0
      %v1363 = vadd.f32 0.0, %v1362
      %v1364 = vpop.f32.mrf.mxu0
      %1365 = vmatprep.mubr.f32.mxu0 0.0
      %1366 = vmatmul.mubr.f32.gmra.mxu0 %v1036
      %v1367 = vpop.f32.mrf.mxu0
      %v1368 = vadd.f32 0.0, %v1367
      %v1369 = vpop.f32.mrf.mxu0
      %1370 = vmatprep.mubr.f32.mxu0 0.0
      %1371 = vmatmul.mubr.f32.gmra.mxu0 %v1039
      %v1372 = vpop.f32.mrf.mxu0
      %v1373 = vadd.f32 0.0, %v1372
      %v1374 = vpop.f32.mrf.mxu0
      %1375 = vmatprep.mubr.f32.mxu0 0.0
      %1376 = vmatmul.mubr.f32.gmra.mxu0 %v1042
      %v1377 = vpop.f32.mrf.mxu0
      %v1378 = vadd.f32 0.0, %v1377
      %v1379 = vpop.f32.mrf.mxu0
      %1380 = vmatprep.mubr.f32.mxu0 0.0
      %1381 = vmatmul.mubr.f32.gmra.mxu0 %v1045
      %v1382 = vpop.f32.mrf.mxu0
      %v1383 = vadd.f32 0.0, %v1382
      %v1384 = vpop.f32.mrf.mxu0
      %1385 = vmatprep.mubr.f32.mxu0 0.0
      %1386 = vmatmul.mubr.f32.gmra.mxu0 %v1048
      %v1387 = vpop.f32.mrf.mxu0
      %v1388 = vadd.f32 0.0, %v1387
      %v1389 = vpop.f32.mrf.mxu0
      %1390 = vmatprep.mubr.f32.mxu0 0.0
      %1391 = vmatmul.mubr.f32.gmra.mxu0 %v1051
      %v1392 = vpop.f32.mrf.mxu0
      %v1393 = vadd.f32 0.0, %v1392
      %v1394 = vpop.f32.mrf.mxu0
      %1395 = vmatprep.mubr.f32.mxu0 0.0
      %1396 = vmatmul.mubr.f32.gmra.mxu0 %v1054
      %v1397 = vpop.f32.mrf.mxu0
      %v1398 = vadd.f32 0.0, %v1397
      %v1399 = vpop.f32.mrf.mxu0
      %1400 = vmatprep.mubr.f32.mxu0 0.0
      %1401 = vmatmul.mubr.f32.gmra.mxu0 %v1057
      %v1402 = vpop.f32.mrf.mxu0
      %v1403 = vadd.f32 0.0, %v1402
      %v1404 = vpop.f32.mrf.mxu0
      %1405 = vmatprep.mubr.f32.mxu0 0.0
      %1406 = vmatmul.mubr.f32.gmra.mxu0 %v1060
      %v1407 = vpop.f32.mrf.mxu0
      %v1408 = vadd.f32 0.0, %v1407
      %v1409 = vpop.f32.mrf.mxu0
      %1410 = vmatprep.mubr.f32.mxu0 0.0
      %1411 = vmatmul.mubr.f32.gmra.mxu0 %v1063
      %v1412 = vpop.f32.mrf.mxu0
      %v1413 = vadd.f32 0.0, %v1412
      %v1414 = vpop.f32.mrf.mxu0
      %1415 = vmatprep.mubr.f32.mxu0 0.0
      %1416 = vmatmul.mubr.f32.gmra.mxu0 %v1066
      %v1417 = vpop.f32.mrf.mxu0
      %v1418 = vadd.f32 0.0, %v1417
      %v1419 = vpop.f32.mrf.mxu0
      %1420 = vmatprep.mubr.f32.mxu0 0.0
      %1421 = vmatmul.mubr.f32.gmra.mxu0 %v1069
      %v1422 = vpop.f32.mrf.mxu0
      %v1423 = vadd.f32 0.0, %v1422
      %v1424 = vpop.f32.mrf.mxu0
      %1425 = vmatprep.mubr.f32.mxu0 0.0
      %1426 = vmatmul.mubr.f32.gmra.mxu0 %v1072
      %v1427 = vpop.f32.mrf.mxu0
      %v1428 = vadd.f32 0.0, %v1427
      %v1429 = vpop.f32.mrf.mxu0
      %1430 = vmatprep.mubr.f32.mxu0 0.0
      %1431 = vmatmul.mubr.f32.gmra.mxu0 %v1075
      %v1432 = vpop.f32.mrf.mxu0
      %v1433 = vadd.f32 0.0, %v1432
      %v1434 = vpop.f32.mrf.mxu0
      %1435 = vmatprep.mubr.f32.mxu0 0.0
      %1436 = vmatmul.mubr.f32.gmra.mxu0 %v1078
      %v1437 = vpop.f32.mrf.mxu0
      %v1438 = vadd.f32 0.0, %v1437
      %v1439 = vpop.f32.mrf.mxu0
      %1440 = vmatprep.mubr.f32.mxu0 0.0
      %1441 = vmatmul.mubr.f32.gmra.mxu0 %v1081
      %v1442 = vpop.f32.mrf.mxu0
      %v1443 = vadd.f32 0.0, %v1442
      %v1444 = vpop.f32.mrf.mxu0
      %1445 = vmatprep.mubr.f32.mxu0 0.0
      %1446 = vmatmul.mubr.f32.gmra.mxu0 %v1084
      %v1447 = vpop.f32.mrf.mxu0
      %v1448 = vadd.f32 0.0, %v1447
      %v1449 = vpop.f32.mrf.mxu0
      %1450 = vmatprep.mubr.f32.mxu0 0.0
      %1451 = vmatmul.mubr.f32.gmra.mxu0 %v1087
      %v1452 = vpop.f32.mrf.mxu0
      %v1453 = vadd.f32 0.0, %v1452
      %v1454 = vpop.f32.mrf.mxu0
      %1455 = vmatprep.mubr.f32.mxu0 0.0
      %1456 = vmatmul.mubr.f32.gmra.mxu0 %v1090
      %v1457 = vpop.f32.mrf.mxu0
      %v1458 = vadd.f32 0.0, %v1457
      %v1459 = vpop.f32.mrf.mxu0
      %1460 = vmatprep.mubr.f32.mxu0 0.0
      %1461 = vmatmul.mubr.f32.gmra.mxu0 %v1093
      %v1462 = vpop.f32.mrf.mxu0
      %v1463 = vadd.f32 0.0, %v1462
      %v1464 = vpop.f32.mrf.mxu0
      %1465 = vmatprep.mubr.f32.mxu0 0.0
      %1466 = vmatmul.mubr.f32.gmra.mxu0 %v1096
      %v1467 = vpop.f32.mrf.mxu0
      %v1468 = vadd.f32 0.0, %v1467
      %v1469 = vpop.f32.mrf.mxu0
      %1470 = vmatprep.mubr.f32.mxu0 0.0
      %1471 = vmatmul.mubr.f32.gmra.mxu0 %v1099
      %v1472 = vpop.f32.mrf.mxu0
      %v1473 = vadd.f32 0.0, %v1472
      %v1474 = vpop.f32.mrf.mxu0
      %1475 = vmatprep.mubr.f32.mxu0 0.0
      %1476 = vmatmul.mubr.f32.gmra.mxu0 %v1102
      %v1477 = vpop.f32.mrf.mxu0
      %v1478 = vadd.f32 0.0, %v1477
      %v1479 = vpop.f32.mrf.mxu0
      %1480 = vmatprep.mubr.f32.mxu0 0.0
      %1481 = vmatmul.mubr.f32.gmra.mxu0 %v1105
      %v1482 = vpop.f32.mrf.mxu0
      %v1483 = vadd.f32 0.0, %v1482
      %v1484 = vpop.f32.mrf.mxu0
      %1485 = vmatprep.mubr.f32.mxu0 0.0
      %1486 = vmatmul.mubr.f32.gmra.mxu0 %v1108
      %v1487 = vpop.f32.mrf.mxu0
      %v1488 = vadd.f32 0.0, %v1487
      %v1489 = vpop.f32.mrf.mxu0
      %1490 = vmatprep.mubr.f32.mxu0 0.0
      %1491 = vmatmul.mubr.f32.gmra.mxu0 %v1111
      %v1492 = vpop.f32.mrf.mxu0
      %v1493 = vadd.f32 0.0, %v1492
      %v1494 = vpop.f32.mrf.mxu0
      %1495 = vmatprep.mubr.f32.mxu0 0.0
      %1496 = vmatmul.mubr.f32.gmra.mxu0 %v1114
      %v1497 = vpop.f32.mrf.mxu0
      %v1498 = vadd.f32 0.0, %v1497
      %v1499 = vpop.f32.mrf.mxu0
      %1500 = vdwg.mxu0
      %vm1501 = vcmask 64512
      %1502 = vst.msk [vmem:[%s199] sm:$0xff] %vm1501, %v1183
      %1503 = vst.msk [vmem:[%s199 + $0x8] sm:$0xff] %vm1501, %v1188
      %1504 = vst.msk [vmem:[%s199 + $0x10] sm:$0xff] %vm1501, %v1193
      %1505 = vst.msk [vmem:[%s199 + $0x18] sm:$0xff] %vm1501, %v1198
      %1506 = vst.msk [vmem:[%s199 + $0x20] sm:$0xff] %vm1501, %v1203
      %1507 = vst.msk [vmem:[%s199 + $0x28] sm:$0xff] %vm1501, %v1208
      %1508 = vst.msk [vmem:[%s199 + $0x30] sm:$0xff] %vm1501, %v1213
      %1509 = vst.msk [vmem:[%s199 + $0x38] sm:$0xff] %vm1501, %v1218
      %1510 = vst.msk [vmem:[%s199 + $0x40] sm:$0xff] %vm1501, %v1223
      %1511 = vst.msk [vmem:[%s199 + $0x48] sm:$0xff] %vm1501, %v1228
      %1512 = vst.msk [vmem:[%s199 + $0x50] sm:$0xff] %vm1501, %v1233
      %1513 = vst.msk [vmem:[%s199 + $0x58] sm:$0xff] %vm1501, %v1238
      %1514 = vst.msk [vmem:[%s199 + $0x60] sm:$0xff] %vm1501, %v1243
      %1515 = vst.msk [vmem:[%s199 + $0x68] sm:$0xff] %vm1501, %v1248
      %1516 = vst.msk [vmem:[%s199 + $0x70] sm:$0xff] %vm1501, %v1253
      %1517 = vst.msk [vmem:[%s199 + $0x78] sm:$0xff] %vm1501, %v1258
      %1518 = vst.msk [vmem:[%s199 + $0x80] sm:$0xff] %vm1501, %v1263
      %1519 = vst.msk [vmem:[%s199 + $0x88] sm:$0xff] %vm1501, %v1268
      %1520 = vst.msk [vmem:[%s199 + $0x90] sm:$0xff] %vm1501, %v1273
      %1521 = vst.msk [vmem:[%s199 + $0x98] sm:$0xff] %vm1501, %v1278
      %1522 = vst.msk [vmem:[%s199 + $0xa0] sm:$0xff] %vm1501, %v1283
      %1523 = vst.msk [vmem:[%s199 + $0xa8] sm:$0xff] %vm1501, %v1288
      %1524 = vst.msk [vmem:[%s199 + $0xb0] sm:$0xff] %vm1501, %v1293
      %1525 = vst.msk [vmem:[%s199 + $0xb8] sm:$0xff] %vm1501, %v1298
      %1526 = vst.msk [vmem:[%s199 + $0xc0] sm:$0xff] %vm1501, %v1303
      %1527 = vst.msk [vmem:[%s199 + $0xc8] sm:$0xff] %vm1501, %v1308
      %1528 = vst.msk [vmem:[%s199 + $0xd0] sm:$0xff] %vm1501, %v1313
      %1529 = vst.msk [vmem:[%s199 + $0xd8] sm:$0xff] %vm1501, %v1318
      %1530 = vst.msk [vmem:[%s199 + $0xe0] sm:$0xff] %vm1501, %v1323
      %1531 = vst.msk [vmem:[%s199 + $0xe8] sm:$0xff] %vm1501, %v1328
      %1532 = vst.msk [vmem:[%s199 + $0xf0] sm:$0xff] %vm1501, %v1333
      %1533 = vst.msk [vmem:[%s199 + $0xf8] sm:$0xff] %vm1501, %v1338
      %1534 = vst.msk [vmem:[%s199 + $0x100] sm:$0xff] %vm1501, %v1343
      %1535 = vst.msk [vmem:[%s199 + $0x108] sm:$0xff] %vm1501, %v1348
      %1536 = vst.msk [vmem:[%s199 + $0x110] sm:$0xff] %vm1501, %v1353
      %1537 = vst.msk [vmem:[%s199 + $0x118] sm:$0xff] %vm1501, %v1358
      %1538 = vst.msk [vmem:[%s199 + $0x120] sm:$0xff] %vm1501, %v1363
      %1539 = vst.msk [vmem:[%s199 + $0x128] sm:$0xff] %vm1501, %v1368
      %1540 = vst.msk [vmem:[%s199 + $0x130] sm:$0xff] %vm1501, %v1373
      %1541 = vst.msk [vmem:[%s199 + $0x138] sm:$0xff] %vm1501, %v1378
      %1542 = vst.msk [vmem:[%s199 + $0x140] sm:$0xff] %vm1501, %v1383
      %1543 = vst.msk [vmem:[%s199 + $0x148] sm:$0xff] %vm1501, %v1388
      %1544 = vst.msk [vmem:[%s199 + $0x150] sm:$0xff] %vm1501, %v1393
      %1545 = vst.msk [vmem:[%s199 + $0x158] sm:$0xff] %vm1501, %v1398
      %1546 = vst.msk [vmem:[%s199 + $0x160] sm:$0xff] %vm1501, %v1403
      %1547 = vst.msk [vmem:[%s199 + $0x168] sm:$0xff] %vm1501, %v1408
      %1548 = vst.msk [vmem:[%s199 + $0x170] sm:$0xff] %vm1501, %v1413
      %1549 = vst.msk [vmem:[%s199 + $0x178] sm:$0xff] %vm1501, %v1418
      %1550 = vst.msk [vmem:[%s199 + $0x180] sm:$0xff] %vm1501, %v1423
      %1551 = vst.msk [vmem:[%s199 + $0x188] sm:$0xff] %vm1501, %v1428
      %1552 = vst.msk [vmem:[%s199 + $0x190] sm:$0xff] %vm1501, %v1433
      %1553 = vst.msk [vmem:[%s199 + $0x198] sm:$0xff] %vm1501, %v1438
      %1554 = vst.msk [vmem:[%s199 + $0x1a0] sm:$0xff] %vm1501, %v1443
      %1555 = vst.msk [vmem:[%s199 + $0x1a8] sm:$0xff] %vm1501, %v1448
      %1556 = vst.msk [vmem:[%s199 + $0x1b0] sm:$0xff] %vm1501, %v1453
      %1557 = vst.msk [vmem:[%s199 + $0x1b8] sm:$0xff] %vm1501, %v1458
      %1558 = vst.msk [vmem:[%s199 + $0x1c0] sm:$0xff] %vm1501, %v1463
      %1559 = vst.msk [vmem:[%s199 + $0x1c8] sm:$0xff] %vm1501, %v1468
      %1560 = vst.msk [vmem:[%s199 + $0x1d0] sm:$0xff] %vm1501, %v1473
      %1561 = vst.msk [vmem:[%s199 + $0x1d8] sm:$0xff] %vm1501, %v1478
      %1562 = vst.msk [vmem:[%s199 + $0x1e0] sm:$0xff] %vm1501, %v1483
      %1563 = vst.msk [vmem:[%s199 + $0x1e8] sm:$0xff] %vm1501, %v1488
      %1564 = vst.msk [vmem:[%s199 + $0x1f0] sm:$0xff] %vm1501, %v1493
      %1565 = vst.msk [vmem:[%s199 + $0x1f8] sm:$0xff] %vm1501, %v1498
      %s1566 = smul.u32 64, %s15
      %p1567 = scmp.lt.s32.totalorder %s1566, 191
      %s1568 = scalar_select %p1567, %s1566, 191
      %s1569 = smul.addr %s1568, 8
      %s1570 = scalar_lea.vmem %s4, %s1569
      // Predicated region
      $region37: #{tpu_custom_call.1} parent=35 // pred_check
        %p1571 = pneg %p122
      $region38: #{tpu_custom_call.1} parent=35 // pred_check_branch
        %1573 = sbr.rel (%p1571) target = $region40
      $region39: #{tpu_custom_call.1} parent=35 // pred_region
        %s1574 = smul.u32 64, %s15
      $region40: #{tpu_custom_call.1} parent=35 // pred_fallthru
        _
    $region36: #{tpu_custom_call.1} parent=5 // pred_fallthru
      _
    %p1575 = scmp.le.s32.totalorder 2, %s10
    // Predicated region
    $region41: #{tpu_custom_call.1} parent=5 // pred_check
      %p1576 = pneg %p1575
    $region42: #{tpu_custom_call.1} parent=5 // pred_check_branch
      %1578 = sbr.rel (%p1576) target = $region44
    $region43: #{tpu_custom_call.1} parent=5 // pred_region
      %s1579 = ssub.s32 %s10, 2
      // Predicated region
      $region45: #{tpu_custom_call.1} parent=43 // pred_check
        %p1580 = pneg %p128
      $region46: #{tpu_custom_call.1} parent=43 // pred_check_branch
        %1582 = sbr.rel (%p1580) target = $region48
      $region47: #{tpu_custom_call.1} parent=43 // pred_region
        %s1583 = smul.u32 64, %s16
        %p1584 = scmp.lt.s32.totalorder %s1583, 191
        %s1585 = scalar_select %p1584, %s1583, 191
        %s1586 = smul.addr %s1585, 8
        %s1587 = scalar_lea.vmem %s4, %s1586
      $region48: #{tpu_custom_call.1} parent=43 // pred_fallthru
        _
    $region44: #{tpu_custom_call.1} parent=5 // pred_fallthru
      _
  $region6: #{tpu_custom_call.1} parent=0 // loop_footer
    %s14 = sadd.s32 1, %s10
  $region7: #{tpu_custom_call.1} parent=0 // loop_footer_branch
    %9 = sbr.rel target = $region3
  $region8: #{tpu_custom_call.1} parent=0 // loop_exit
    _

</llo_original>
